<compile_context>
chip_gen: v5e
topology: v5e:2x2
jax: 0.10.0
libtpu: 0.0.40
codegen_flags: <defaults>
</compile_context>

<pallas_src>
import jax
import jax.numpy as jnp
from jax.experimental import pallas as pl
from jax.experimental.pallas import tpu as pltpu

_VMEM = pl.BlockSpec(memory_space=pltpu.MemorySpace.VMEM)


def _round_up(x, m):
    return (x + m - 1) // m * m


# ------------------------------ fused kernel --------------------------------

def make_decoder_kernel(num_layers, hidden_size, in_pad, lin_pad):
    """Fused single-step LSTM decoder + Linear head.

    Ref layout:
      x (B, in_pad) f32, h (L, B, H) f32, c (L, B, H) f32,
      w_all (L, OFF+H, 4H) bf16   rows [0:in_dim]=W_ih^T, rows [OFF:OFF+H]=W_hh^T,
      b_all (L, 1, 4H) f32        pre-summed b_ih + b_hh,
      w_lin (H, lin_pad) bf16, b_lin (1, lin_pad) f32,
      out (B, 2*L*H + lin_pad) f32  = [h_0..h_{L-1} | c_0..c_{L-1} | pred_pad]
    """
    L, H = num_layers, hidden_size
    OFF = max(in_pad, H)  # row offset of W_hh^T inside the packed weight slab

    def kernel(x_ref, h_ref, c_ref, w_ref, b_ref, wlin_ref, blin_ref, out_ref):
        layer_in = x_ref[...]                                   # (B, in_pad) f32
        hs, cs = [], []
        for l in range(L):                                      # unrolled, VMEM-resident
            in_rows = in_pad if l == 0 else H
            h_prev = h_ref[l]                                   # (B, H) f32
            c_prev = c_ref[l]
            # Two MXU dots instead of a lane-offset concat + one dot.
            g_x = jnp.dot(layer_in.astype(jnp.bfloat16),
                          w_ref[l, 0:in_rows, :],
                          preferred_element_type=jnp.float32)
            g_h = jnp.dot(h_prev.astype(jnp.bfloat16),
                          w_ref[l, OFF:OFF + H, :],
                          preferred_element_type=jnp.float32)
            gates = g_x + g_h + b_ref[l]                        # (B, 4H) f32
            # torch gate order: i, f, g, o
            i_g = jax.nn.sigmoid(gates[:, 0 * H:1 * H])
            f_g = jax.nn.sigmoid(gates[:, 1 * H:2 * H])
            g_g = jnp.tanh(gates[:, 2 * H:3 * H])
            o_g = jax.nn.sigmoid(gates[:, 3 * H:4 * H])
            c_new = f_g * c_prev + i_g * g_g
            h_new = o_g * jnp.tanh(c_new)
            hs.append(h_new)
            cs.append(c_new)
            layer_in = h_new

        pred = (jnp.dot(layer_in.astype(jnp.bfloat16), wlin_ref[...],
                        preferred_element_type=jnp.float32)
                + blin_ref[...])                                # (B, lin_pad), lane dense
        # Single lane-dense output slab (one unmasked store, one DMA).
        out_ref[...] = jnp.concatenate(hs + cs + [pred], axis=-1)

    return kernel


# -------------------------------- wrapper ------------------------------------

def decoder_forward(params, x, h, c):
    """x: (B, input_size); h, c: (L, B, H). Single gridless pallas_call."""
    L, B, H = h.shape
    in_size = x.shape[1]
    in_pad = params["in_pad"]
    lin_pad = params["lin_pad"]
    if in_size < in_pad:
        x = jnp.pad(x, ((0, 0), (0, in_pad - in_size)))

    out = pl.pallas_call(
        make_decoder_kernel(L, H, in_pad, lin_pad),
        out_shape=jax.ShapeDtypeStruct((B, 2 * L * H + lin_pad), jnp.float32),
        in_specs=[_VMEM] * 7,
        out_specs=_VMEM,
    )(x, h, c, params["w_all"], params["b_all"], params["w_lin"], params["b_lin"])

    # Layout plumbing only: slab -> (L, B, H) state + (B, In) prediction.
    h_new = out[:, :L * H].reshape(B, L, H).transpose(1, 0, 2)
    c_new = out[:, L * H:2 * L * H].reshape(B, L, H).transpose(1, 0, 2)
    pred = out[:, 2 * L * H:2 * L * H + in_size]
    return pred, h_new, c_new


# --------------------------- parameter creation ------------------------------

def init_decoder_params(key, input_size, hidden_size, num_layers):
    """PyTorch-style U(-1/sqrt(H), 1/sqrt(H)); weights pre-packed & padded."""
    H = hidden_size
    bound = 1.0 / (H ** 0.5)
    in_pad = _round_up(input_size, 8)
    OFF = max(in_pad, H)
    R = OFF + H
    lin_pad = _round_up(input_size, 128)

    w_all = jnp.zeros((num_layers, R, 4 * H), jnp.float32)
    b_all = jnp.zeros((num_layers, 1, 4 * H), jnp.float32)
    for l in range(num_layers):
        in_dim = input_size if l == 0 else H
        key, k1, k2, k3, k4 = jax.random.split(key, 5)
        w_ih = jax.random.uniform(k1, (4 * H, in_dim), jnp.float32, -bound, bound)
        w_hh = jax.random.uniform(k2, (4 * H, H), jnp.float32, -bound, bound)
        b_ih = jax.random.uniform(k3, (4 * H,), jnp.float32, -bound, bound)
        b_hh = jax.random.uniform(k4, (4 * H,), jnp.float32, -bound, bound)
        w_all = w_all.at[l, 0:in_dim, :].set(w_ih.T)
        w_all = w_all.at[l, OFF:OFF + H, :].set(w_hh.T)
        b_all = b_all.at[l, 0, :].set(b_ih + b_hh)          # pre-summed bias

    key, k5, k6 = jax.random.split(key, 3)
    w_lin = jax.random.uniform(k5, (input_size, H), jnp.float32, -bound, bound)
    b_lin = jax.random.uniform(k6, (input_size,), jnp.float32, -bound, bound)
    w_lin_pad = jnp.zeros((H, lin_pad), jnp.float32).at[:, :input_size].set(w_lin.T)
    b_lin_pad = jnp.zeros((1, lin_pad), jnp.float32).at[0, :input_size].set(b_lin)

    return {
        "w_all": w_all.astype(jnp.bfloat16),   # bf16 MXU operands
        "b_all": b_all,                        # f32 (pointwise math stays f32)
        "w_lin": w_lin_pad.astype(jnp.bfloat16),
        "b_lin": b_lin_pad,
        "in_pad": in_pad,
        "lin_pad": lin_pad,
    }


# --------------------------- pure-JAX reference -------------------------------

def decoder_reference(params, x, h, c):
    L, B, H = h.shape
    in_size = x.shape[1]
    in_pad = params["in_pad"]
    OFF = max(in_pad, H)
    if in_size < in_pad:
        x = jnp.pad(x, ((0, 0), (0, in_pad - in_size)))
    layer_in = x
    h_out, c_out = [], []
    for l in range(L):
        in_rows = in_pad if l == 0 else H
        gates = (jnp.dot(layer_in.astype(jnp.bfloat16),
                         params["w_all"][l, 0:in_rows, :],
                         preferred_element_type=jnp.float32)
                 + jnp.dot(h[l].astype(jnp.bfloat16),
                           params["w_all"][l, OFF:OFF + H, :],
                           preferred_element_type=jnp.float32)
                 + params["b_all"][l])
        i_g = jax.nn.sigmoid(gates[:, 0 * H:1 * H])
        f_g = jax.nn.sigmoid(gates[:, 1 * H:2 * H])
        g_g = jnp.tanh(gates[:, 2 * H:3 * H])
        o_g = jax.nn.sigmoid(gates[:, 3 * H:4 * H])
        c_new = f_g * c[l] + i_g * g_g
        h_new = o_g * jnp.tanh(c_new)
        h_out.append(h_new)
        c_out.append(c_new)
        layer_in = h_new
    pred = (jnp.dot(layer_in.astype(jnp.bfloat16), params["w_lin"],
                    preferred_element_type=jnp.float32)
            + params["b_lin"])[:, :in_size]
    return pred, jnp.stack(h_out, axis=0), jnp.stack(c_out, axis=0)


# ----------------------------------- main -------------------------------------

if __name__ == "__main__":
    input_size = 8
    hidden_size = 32
    num_layers = 2
    output_size = 8   # unused by forward (matches the PyTorch module)
    batch_size = 8    # fills all 8 sublanes / MXU M dim

    root = jax.random.PRNGKey(0)
    k_params, k_x, k_h, k_c = jax.random.split(root, 4)

    params = init_decoder_params(k_params, input_size, hidden_size, num_layers)

    x = jax.random.normal(k_x, (batch_size, input_size), jnp.float32)
    h0 = jax.random.normal(k_h, (num_layers, batch_size, hidden_size), jnp.float32)
    c0 = jax.random.normal(k_c, (num_layers, batch_size, hidden_size), jnp.float32)

    pred, h1, c1 = decoder_forward(params, x, h0, c0)
    jax.block_until_ready((pred, h1, c1))

    pred_r, h1_r, c1_r = decoder_reference(params, x, h0, c0)
    assert pred.shape == (batch_size, input_size)
    assert h1.shape == (num_layers, batch_size, hidden_size)
    assert c1.shape == (num_layers, batch_size, hidden_size)
    assert jnp.allclose(pred, pred_r, atol=1e-4), "pred mismatch"
    assert jnp.allclose(h1, h1_r, atol=1e-4), "h mismatch"
    assert jnp.allclose(c1, c1_r, atol=1e-4), "c mismatch"

    print("KERNEL_OK")
</pallas_src>

<mosaic_0001>
module attributes {stable_mosaic.version = 11 : i64} {
  func.func @kernel(%arg0: memref<8x8xf32, #tpu.memory_space<vmem>>, %arg1: memref<2x8x32xf32, #tpu.memory_space<vmem>>, %arg2: memref<2x8x32xf32, #tpu.memory_space<vmem>>, %arg3: memref<2x64x128xbf16, #tpu.memory_space<vmem>>, %arg4: memref<2x1x128xf32, #tpu.memory_space<vmem>>, %arg5: memref<32x128xbf16, #tpu.memory_space<vmem>>, %arg6: memref<1x128xf32, #tpu.memory_space<vmem>>, %arg7: memref<8x256xf32, #tpu.memory_space<vmem>>) attributes {dimension_semantics = [], scalar_prefetch = 0 : i64, scratch_operands = 0 : i64, tpu.core_type = #tpu.core_type<tc>} {
    %c0 = arith.constant 0 : index
    %c0_0 = arith.constant 0 : index
    %0 = vector.load %arg0[%c0, %c0_0] : memref<8x8xf32, #tpu.memory_space<vmem>>, vector<8x8xf32>
    %c0_1 = arith.constant 0 : index
    %c0_2 = arith.constant 0 : index
    %c0_3 = arith.constant 0 : index
    %1 = vector.load %arg1[%c0_1, %c0_2, %c0_3] : memref<2x8x32xf32, #tpu.memory_space<vmem>>, vector<1x8x32xf32>
    %2 = vector.shape_cast %1 : vector<1x8x32xf32> to vector<8x32xf32>
    %c0_4 = arith.constant 0 : index
    %c0_5 = arith.constant 0 : index
    %c0_6 = arith.constant 0 : index
    %3 = vector.load %arg2[%c0_4, %c0_5, %c0_6] : memref<2x8x32xf32, #tpu.memory_space<vmem>>, vector<1x8x32xf32>
    %4 = vector.shape_cast %3 : vector<1x8x32xf32> to vector<8x32xf32>
    %5 = arith.truncf %0 : vector<8x8xf32> to vector<8x8xbf16>
    %c0_7 = arith.constant 0 : index
    %c0_8 = arith.constant 0 : index
    %c0_9 = arith.constant 0 : index
    %6 = vector.load %arg3[%c0_7, %c0_8, %c0_9] : memref<2x64x128xbf16, #tpu.memory_space<vmem>>, vector<1x8x128xbf16>
    %7 = vector.shape_cast %6 : vector<1x8x128xbf16> to vector<8x128xbf16>
    %cst = arith.constant dense<0.000000e+00> : vector<8x128xf32>
    %8 = tpu.matmul %5, %7, %cst {dimension_numbers = #tpu.dot_dimension_numbers<[1], [0], [0], [1], [0, 0, 1, 1], [], []>} : vector<8x8xbf16>, vector<8x128xbf16>, vector<8x128xf32> -> vector<8x128xf32>
    %9 = arith.truncf %2 : vector<8x32xf32> to vector<8x32xbf16>
    %c0_10 = arith.constant 0 : index
    %c32 = arith.constant 32 : index
    %c0_11 = arith.constant 0 : index
    %10 = vector.load %arg3[%c0_10, %c32, %c0_11] : memref<2x64x128xbf16, #tpu.memory_space<vmem>>, vector<1x32x128xbf16>
    %11 = vector.shape_cast %10 : vector<1x32x128xbf16> to vector<32x128xbf16>
    %cst_12 = arith.constant dense<0.000000e+00> : vector<8x128xf32>
    %12 = tpu.matmul %9, %11, %cst_12 {dimension_numbers = #tpu.dot_dimension_numbers<[1], [0], [0], [1], [0, 0, 1, 1], [], []>} : vector<8x32xbf16>, vector<32x128xbf16>, vector<8x128xf32> -> vector<8x128xf32>
    %13 = arith.addf %8, %12 : vector<8x128xf32>
    %c0_13 = arith.constant 0 : index
    %c0_14 = arith.constant 0 : index
    %c0_15 = arith.constant 0 : index
    %14 = vector.load %arg4[%c0_13, %c0_14, %c0_15] : memref<2x1x128xf32, #tpu.memory_space<vmem>>, vector<1x1x128xf32>
    %15 = vector.shape_cast %14 : vector<1x1x128xf32> to vector<1x128xf32>
    %16 = vector.broadcast %15 : vector<1x128xf32> to vector<8x128xf32>
    %17 = arith.addf %13, %16 : vector<8x128xf32>
    %18 = vector.extract_strided_slice %17 {offsets = [0, 0], sizes = [8, 32], strides = [1, 1]} : vector<8x128xf32> to vector<8x32xf32>
    %19 = arith.negf %18 : vector<8x32xf32>
    %20 = math.exp %19 : vector<8x32xf32>
    %cst_16 = arith.constant 1.000000e+00 : f32
    %21 = vector.broadcast %cst_16 : f32 to vector<8x32xf32>
    %22 = arith.addf %21, %20 : vector<8x32xf32>
    %23 = arith.divf %21, %22 : vector<8x32xf32>
    %24 = vector.extract_strided_slice %17 {offsets = [0, 32], sizes = [8, 32], strides = [1, 1]} : vector<8x128xf32> to vector<8x32xf32>
    %25 = arith.negf %24 : vector<8x32xf32>
    %26 = math.exp %25 : vector<8x32xf32>
    %cst_17 = arith.constant 1.000000e+00 : f32
    %27 = vector.broadcast %cst_17 : f32 to vector<8x32xf32>
    %28 = arith.addf %27, %26 : vector<8x32xf32>
    %29 = arith.divf %27, %28 : vector<8x32xf32>
    %30 = vector.extract_strided_slice %17 {offsets = [0, 64], sizes = [8, 32], strides = [1, 1]} : vector<8x128xf32> to vector<8x32xf32>
    %31 = math.tanh %30 : vector<8x32xf32>
    %32 = vector.extract_strided_slice %17 {offsets = [0, 96], sizes = [8, 32], strides = [1, 1]} : vector<8x128xf32> to vector<8x32xf32>
    %33 = arith.negf %32 : vector<8x32xf32>
    %34 = math.exp %33 : vector<8x32xf32>
    %cst_18 = arith.constant 1.000000e+00 : f32
    %35 = vector.broadcast %cst_18 : f32 to vector<8x32xf32>
    %36 = arith.addf %35, %34 : vector<8x32xf32>
    %37 = arith.divf %35, %36 : vector<8x32xf32>
    %38 = arith.mulf %29, %4 : vector<8x32xf32>
    %39 = arith.mulf %23, %31 : vector<8x32xf32>
    %40 = arith.addf %38, %39 : vector<8x32xf32>
    %41 = math.tanh %40 : vector<8x32xf32>
    %42 = arith.mulf %37, %41 : vector<8x32xf32>
    %c1 = arith.constant 1 : index
    %c0_19 = arith.constant 0 : index
    %c0_20 = arith.constant 0 : index
    %43 = vector.load %arg1[%c1, %c0_19, %c0_20] : memref<2x8x32xf32, #tpu.memory_space<vmem>>, vector<1x8x32xf32>
    %44 = vector.shape_cast %43 : vector<1x8x32xf32> to vector<8x32xf32>
    %c1_21 = arith.constant 1 : index
    %c0_22 = arith.constant 0 : index
    %c0_23 = arith.constant 0 : index
    %45 = vector.load %arg2[%c1_21, %c0_22, %c0_23] : memref<2x8x32xf32, #tpu.memory_space<vmem>>, vector<1x8x32xf32>
    %46 = vector.shape_cast %45 : vector<1x8x32xf32> to vector<8x32xf32>
    %47 = arith.truncf %42 : vector<8x32xf32> to vector<8x32xbf16>
    %c1_24 = arith.constant 1 : index
    %c0_25 = arith.constant 0 : index
    %c0_26 = arith.constant 0 : index
    %48 = vector.load %arg3[%c1_24, %c0_25, %c0_26] : memref<2x64x128xbf16, #tpu.memory_space<vmem>>, vector<1x32x128xbf16>
    %49 = vector.shape_cast %48 : vector<1x32x128xbf16> to vector<32x128xbf16>
    %cst_27 = arith.constant dense<0.000000e+00> : vector<8x128xf32>
    %50 = tpu.matmul %47, %49, %cst_27 {dimension_numbers = #tpu.dot_dimension_numbers<[1], [0], [0], [1], [0, 0, 1, 1], [], []>} : vector<8x32xbf16>, vector<32x128xbf16>, vector<8x128xf32> -> vector<8x128xf32>
    %51 = arith.truncf %44 : vector<8x32xf32> to vector<8x32xbf16>
    %c1_28 = arith.constant 1 : index
    %c32_29 = arith.constant 32 : index
    %c0_30 = arith.constant 0 : index
    %52 = vector.load %arg3[%c1_28, %c32_29, %c0_30] : memref<2x64x128xbf16, #tpu.memory_space<vmem>>, vector<1x32x128xbf16>
    %53 = vector.shape_cast %52 : vector<1x32x128xbf16> to vector<32x128xbf16>
    %cst_31 = arith.constant dense<0.000000e+00> : vector<8x128xf32>
    %54 = tpu.matmul %51, %53, %cst_31 {dimension_numbers = #tpu.dot_dimension_numbers<[1], [0], [0], [1], [0, 0, 1, 1], [], []>} : vector<8x32xbf16>, vector<32x128xbf16>, vector<8x128xf32> -> vector<8x128xf32>
    %55 = arith.addf %50, %54 : vector<8x128xf32>
    %c1_32 = arith.constant 1 : index
    %c0_33 = arith.constant 0 : index
    %c0_34 = arith.constant 0 : index
    %56 = vector.load %arg4[%c1_32, %c0_33, %c0_34] : memref<2x1x128xf32, #tpu.memory_space<vmem>>, vector<1x1x128xf32>
    %57 = vector.shape_cast %56 : vector<1x1x128xf32> to vector<1x128xf32>
    %58 = vector.broadcast %57 : vector<1x128xf32> to vector<8x128xf32>
    %59 = arith.addf %55, %58 : vector<8x128xf32>
    %60 = vector.extract_strided_slice %59 {offsets = [0, 0], sizes = [8, 32], strides = [1, 1]} : vector<8x128xf32> to vector<8x32xf32>
    %61 = arith.negf %60 : vector<8x32xf32>
    %62 = math.exp %61 : vector<8x32xf32>
    %cst_35 = arith.constant 1.000000e+00 : f32
    %63 = vector.broadcast %cst_35 : f32 to vector<8x32xf32>
    %64 = arith.addf %63, %62 : vector<8x32xf32>
    %65 = arith.divf %63, %64 : vector<8x32xf32>
    %66 = vector.extract_strided_slice %59 {offsets = [0, 32], sizes = [8, 32], strides = [1, 1]} : vector<8x128xf32> to vector<8x32xf32>
    %67 = arith.negf %66 : vector<8x32xf32>
    %68 = math.exp %67 : vector<8x32xf32>
    %cst_36 = arith.constant 1.000000e+00 : f32
    %69 = vector.broadcast %cst_36 : f32 to vector<8x32xf32>
    %70 = arith.addf %69, %68 : vector<8x32xf32>
    %71 = arith.divf %69, %70 : vector<8x32xf32>
    %72 = vector.extract_strided_slice %59 {offsets = [0, 64], sizes = [8, 32], strides = [1, 1]} : vector<8x128xf32> to vector<8x32xf32>
    %73 = math.tanh %72 : vector<8x32xf32>
    %74 = vector.extract_strided_slice %59 {offsets = [0, 96], sizes = [8, 32], strides = [1, 1]} : vector<8x128xf32> to vector<8x32xf32>
    %75 = arith.negf %74 : vector<8x32xf32>
    %76 = math.exp %75 : vector<8x32xf32>
    %cst_37 = arith.constant 1.000000e+00 : f32
    %77 = vector.broadcast %cst_37 : f32 to vector<8x32xf32>
    %78 = arith.addf %77, %76 : vector<8x32xf32>
    %79 = arith.divf %77, %78 : vector<8x32xf32>
    %80 = arith.mulf %71, %46 : vector<8x32xf32>
    %81 = arith.mulf %65, %73 : vector<8x32xf32>
    %82 = arith.addf %80, %81 : vector<8x32xf32>
    %83 = math.tanh %82 : vector<8x32xf32>
    %84 = arith.mulf %79, %83 : vector<8x32xf32>
    %85 = arith.truncf %84 : vector<8x32xf32> to vector<8x32xbf16>
    %c0_38 = arith.constant 0 : index
    %c0_39 = arith.constant 0 : index
    %86 = vector.load %arg5[%c0_38, %c0_39] : memref<32x128xbf16, #tpu.memory_space<vmem>>, vector<32x128xbf16>
    %cst_40 = arith.constant dense<0.000000e+00> : vector<8x128xf32>
    %87 = tpu.matmul %85, %86, %cst_40 {dimension_numbers = #tpu.dot_dimension_numbers<[1], [0], [0], [1], [0, 0, 1, 1], [], []>} : vector<8x32xbf16>, vector<32x128xbf16>, vector<8x128xf32> -> vector<8x128xf32>
    %c0_41 = arith.constant 0 : index
    %c0_42 = arith.constant 0 : index
    %88 = vector.load %arg6[%c0_41, %c0_42] : memref<1x128xf32, #tpu.memory_space<vmem>>, vector<1x128xf32>
    %89 = vector.broadcast %88 : vector<1x128xf32> to vector<8x128xf32>
    %90 = arith.addf %87, %89 : vector<8x128xf32>
    %91 = tpu.concatenate %42, %84, %40, %82, %90 in 1 : vector<8x32xf32>, vector<8x32xf32>, vector<8x32xf32>, vector<8x32xf32>, vector<8x128xf32> -> vector<8x256xf32>
    %c0_43 = arith.constant 0 : index
    %c0_44 = arith.constant 0 : index
    %92 = vector.load %arg7[%c0_43, %c0_44] : memref<8x256xf32, #tpu.memory_space<vmem>>, vector<8x256xf32>
    tpu.vector_store %arg7[%c0_43, %c0_44], %91 {strides = array<i32>} : memref<8x256xf32, #tpu.memory_space<vmem>>, vector<8x256xf32>,
    return
  }
}

</mosaic_0001>

<llo_original>
// kernel: tpu_custom_call.1
$region0: #{tpu_custom_call.1}
  #allocation0 [shape = 'u32[]', space=smem, size = 0x4, offset = 0x4, fixed_abs, tag = 'smem constant byte address 0x4 - core index']
  #allocation1 [shape = 'u32[72,128]{1,0:T(1,128)}', space=vmem, size = 0x9000, scoped, tag = 'internal scratch']
  %s0 = inlined_call_operand.hbm [shape: f32[8,8], index: 0, kind: input, shape index: {}]
  %s1 = inlined_call_operand.hbm [shape: f32[2,8,32], index: 1, kind: input, shape index: {}]
  %s2 = inlined_call_operand.hbm [shape: f32[2,8,32], index: 2, kind: input, shape index: {}]
  %s3 = inlined_call_operand.hbm [shape: bf16[2,64,128], index: 3, kind: input, shape index: {}]
  %s4 = inlined_call_operand.vmem [shape: f32[2,1,128], index: 4, kind: input, shape index: {}]
  %s5 = inlined_call_operand.hbm [shape: bf16[32,128], index: 5, kind: input, shape index: {}]
  %s6 = inlined_call_operand.vmem [shape: f32[1,128], index: 6, kind: input, shape index: {}]
  %s7 = inlined_call_operand.hbm [shape: f32[8,256], index: 7, kind: output, shape index: {}]
  %s8 = sld [smem:[#allocation0]]
  $region58: #{tpu_custom_call.1} parent=0
    _
  %s10 = ssub.s32 1, %s8
  %s11 = scalar_select 0, %s10, %s8
  $region1: #{tpu_custom_call.1} parent=0
    #allocation2 [shape = 'u8[4096]{0}', space=vmem, size = 0x1000, scoped, tag = 'input window, operand 0, single buffered']
    #allocation3 [shape = 's32[1]{0}', space=sflag, size = 0x4, scoped, tag = 'scoped memory for tpu_custom_call.1']
    #allocation4 [shape = 's32[1]{0}', space=sflag, size = 0x4, scoped, tag = 'scoped memory for tpu_custom_call.1']
    #allocation5 [shape = 'u8[8192]{0}', space=vmem, size = 0x2000, scoped, tag = 'input window, operand 1, single buffered']
    #allocation6 [shape = 's32[1]{0}', space=sflag, size = 0x4, scoped, tag = 'scoped memory for tpu_custom_call.1']
    #allocation7 [shape = 'u8[8192]{0}', space=vmem, size = 0x2000, scoped, tag = 'input window, operand 2, single buffered']
    #allocation8 [shape = 'u8[32768]{0}', space=vmem, size = 0x8000, scoped, tag = 'input window, operand 3, single buffered']
    #allocation9 [shape = 's32[1]{0}', space=sflag, size = 0x4, scoped, tag = 'scoped memory for tpu_custom_call.1']
    #allocation10 [shape = 'u8[8192]{0}', space=vmem, size = 0x2000, scoped, tag = 'input window, operand 5, single buffered']
    #allocation11 [shape = 'u8[8192]{0}', space=vmem, size = 0x2000, scoped, tag = 'output window, operand 0, single buffered']
    %12 = vsyncpa [#allocation3], 0
    %13 = vsyncpa [#allocation6], 0
    %14 = vsyncpa [#allocation9], 0
    %15 = vsyncpa [#allocation4], 0
    // Predicated region
    $region2: #{tpu_custom_call.1} parent=1 // pred_check
      _
    $region3: #{tpu_custom_call.1} parent=1 // pred_check_branch
      %17 = sbr.rel (0) target = $region5
    $region4: #{tpu_custom_call.1} parent=1 // pred_region
      %19 = vsyncadd [#allocation3], 0
      %s21 = sshll.u32 %s0, 4
      %s22 = int_to_ptr.hbm [resolvable:$true] %s21
      %s23 = sshll.u32 [#allocation2], 4
      %s24 = int_to_ptr.vmem [resolvable:$true] %s23
      %26 = dma.hbm_to_vmem [thread:$0]  %s22, 128, %s24, [#allocation3]
    $region5: #{tpu_custom_call.1} parent=1 // pred_fallthru
      _
    // Predicated region
    $region6: #{tpu_custom_call.1} parent=1 // pred_check
      _
    $region7: #{tpu_custom_call.1} parent=1 // pred_check_branch
      %28 = sbr.rel (0) target = $region9
    $region8: #{tpu_custom_call.1} parent=1 // pred_region
      %30 = vsyncadd [#allocation6], 0
      %s31 = sshll.u32 %s1, 4
      %s32 = int_to_ptr.hbm [resolvable:$true] %s31
      %s33 = sshll.u32 [#allocation5], 4
      %s34 = int_to_ptr.vmem [resolvable:$true] %s33
      %39 = dma.hbm_to_vmem [thread:$0]  %s32, 256, %s34, [#allocation6], 128, 128, 8
    $region9: #{tpu_custom_call.1} parent=1 // pred_fallthru
      _
    // Predicated region
    $region10: #{tpu_custom_call.1} parent=1 // pred_check
      _
    $region11: #{tpu_custom_call.1} parent=1 // pred_check_branch
      %41 = sbr.rel (0) target = $region13
    $region12: #{tpu_custom_call.1} parent=1 // pred_region
      %43 = vsyncadd [#allocation6], 0
      %s44 = sshll.u32 %s2, 4
      %s45 = int_to_ptr.hbm [resolvable:$true] %s44
      %s46 = sshll.u32 [#allocation7], 4
      %s47 = int_to_ptr.vmem [resolvable:$true] %s46
      %52 = dma.hbm_to_vmem [thread:$0]  %s45, 256, %s47, [#allocation6], 128, 128, 8
    $region13: #{tpu_custom_call.1} parent=1 // pred_fallthru
      _
    // Predicated region
    $region14: #{tpu_custom_call.1} parent=1 // pred_check
      _
    $region15: #{tpu_custom_call.1} parent=1 // pred_check_branch
      %54 = sbr.rel (0) target = $region17
    $region16: #{tpu_custom_call.1} parent=1 // pred_region
      %56 = vsyncadd [#allocation9], 0
      %s57 = sshll.u32 %s3, 4
      %s58 = int_to_ptr.hbm [resolvable:$true] %s57
      %s59 = sshll.u32 [#allocation8], 4
      %s60 = int_to_ptr.vmem [resolvable:$true] %s59
      %65 = dma.hbm_to_vmem [thread:$0]  %s58, 1024, %s60, [#allocation9], 64, 64, 4
    $region17: #{tpu_custom_call.1} parent=1 // pred_fallthru
      _
    // Predicated region
    $region18: #{tpu_custom_call.1} parent=1 // pred_check
      _
    $region19: #{tpu_custom_call.1} parent=1 // pred_check_branch
      %67 = sbr.rel (0) target = $region21
    $region20: #{tpu_custom_call.1} parent=1 // pred_region
      _
    $region21: #{tpu_custom_call.1} parent=1 // pred_fallthru
      _
    // Predicated region
    $region22: #{tpu_custom_call.1} parent=1 // pred_check
      _
    $region23: #{tpu_custom_call.1} parent=1 // pred_check_branch
      %69 = sbr.rel (0) target = $region25
    $region24: #{tpu_custom_call.1} parent=1 // pred_region
      %71 = vsyncadd [#allocation9], 0
      %s72 = sshll.u32 %s5, 4
      %s73 = int_to_ptr.hbm [resolvable:$true] %s72
      %s74 = sshll.u32 [#allocation10], 4
      %s75 = int_to_ptr.vmem [resolvable:$true] %s74
      %80 = dma.hbm_to_vmem [thread:$0]  %s73, 256, %s75, [#allocation9], 64, 64, 4
    $region25: #{tpu_custom_call.1} parent=1 // pred_fallthru
      _
    // Predicated region
    $region26: #{tpu_custom_call.1} parent=1 // pred_check
      _
    $region27: #{tpu_custom_call.1} parent=1 // pred_check_branch
      %82 = sbr.rel (0) target = $region29
    $region28: #{tpu_custom_call.1} parent=1 // pred_region
      _
    $region29: #{tpu_custom_call.1} parent=1 // pred_fallthru
      _
    // Predicated region
    $region30: #{tpu_custom_call.1} parent=1 // pred_check
      _
    $region31: #{tpu_custom_call.1} parent=1 // pred_check_branch
      %84 = sbr.rel (0) target = $region33
    $region32: #{tpu_custom_call.1} parent=1 // pred_region
      %86 = dma.done [#allocation3], 128
    $region33: #{tpu_custom_call.1} parent=1 // pred_fallthru
      _
    // Predicated region
    $region34: #{tpu_custom_call.1} parent=1 // pred_check
      _
    $region35: #{tpu_custom_call.1} parent=1 // pred_check_branch
      %88 = sbr.rel (0) target = $region37
    $region36: #{tpu_custom_call.1} parent=1 // pred_region
      %90 = dma.done [#allocation6], 256
    $region37: #{tpu_custom_call.1} parent=1 // pred_fallthru
      _
    // Predicated region
    $region38: #{tpu_custom_call.1} parent=1 // pred_check
      _
    $region39: #{tpu_custom_call.1} parent=1 // pred_check_branch
      %92 = sbr.rel (0) target = $region41
    $region40: #{tpu_custom_call.1} parent=1 // pred_region
      %94 = dma.done [#allocation6], 256
    $region41: #{tpu_custom_call.1} parent=1 // pred_fallthru
      _
    // Predicated region
    $region42: #{tpu_custom_call.1} parent=1 // pred_check
      _
    $region43: #{tpu_custom_call.1} parent=1 // pred_check_branch
      %96 = sbr.rel (0) target = $region45
    $region44: #{tpu_custom_call.1} parent=1 // pred_region
      %98 = dma.done [#allocation9], 1024
    $region45: #{tpu_custom_call.1} parent=1 // pred_fallthru
      _
    // Predicated region
    $region46: #{tpu_custom_call.1} parent=1 // pred_check
      _
    $region47: #{tpu_custom_call.1} parent=1 // pred_check_branch
      %100 = sbr.rel (0) target = $region49
    $region48: #{tpu_custom_call.1} parent=1 // pred_region
      %102 = dma.done [#allocation9], 256
    $region49: #{tpu_custom_call.1} parent=1 // pred_fallthru
      _
    %v104 = vld [vmem:[#allocation2] sm:$0xff]
    %v105 = vld [vmem:[#allocation5] sm:$0xff]
    %v106 = vld [vmem:[#allocation7] sm:$0xff]
    %v107 = vpack.c.bf16 %v104, %v104
    %v108 = vld [vmem:[#allocation8] sm:$0xf]
    %v109 = vpack.c.bf16 %v105, %v105
    %v110 = vld [vmem:[#allocation8 + $0x10] sm:$0xf]
    %v111 = vld [vmem:[#allocation8 + $0x14] sm:$0xf]
    %v112 = vld [vmem:[#allocation8 + $0x18] sm:$0xf]
    %v113 = vld [vmem:[#allocation8 + $0x1c] sm:$0xf]
    %v118 = vunpack.c.l.b16 %v110
    %v119 = vunpack.c.l.b16 %v111
    %v120 = vunpack.c.l.b16 %v112
    %v121 = vunpack.c.l.b16 %v113
    %v122 = vpack.c.b16 %v119, %v118
    %v123 = vpack.c.b16 %v121, %v120
    %vm126 = vcmask 261120
    %v128 = vsel %vm126, %v109, 0
    %130 = vmatpush.bf16.msra.mxu0 0
    %131 = vmatpush.bf16.msra.mxu0 0
    %132 = vmatpush.bf16.msra.mxu0 0
    %133 = vmatpush.bf16.msra.mxu0 0
    %134 = vmatpush.bf16.msra.mxu0 0
    %135 = vmatpush.bf16.msra.mxu0 0
    %136 = vmatpush.bf16.msra.mxu0 %v123
    %137 = vmatpush.bf16.msra.mxu0 %v122
    %138 = vmatmul.bf16.gmra.mxu0 %v128
    %v139 = vpop.f32.mrf.mxu0
    %v140 = vadd.f32 0.0, %v139
    %v141 = vpop.f32.mrf.mxu0
    %142 = vdwg.mxu0
    %vm143 = vcmask 64512
    %v145 = vsel %vm143, %v107, 0
    %vm147 = vcmask 1043456
    %v149 = vsel %vm147, %v108, 0
    %151 = vmatpush.bf16.msra.mxu0 0
    %152 = vmatpush.bf16.msra.mxu0 0
    %153 = vmatpush.bf16.msra.mxu0 0
    %154 = vmatpush.bf16.msra.mxu0 0
    %155 = vmatpush.bf16.msra.mxu0 0
    %156 = vmatpush.bf16.msra.mxu0 0
    %157 = vmatpush.bf16.msra.mxu0 0
    %158 = vmatpush.bf16.msra.mxu0 %v149
    %159 = vmatmul.bf16.gmra.mxu0 %v145
    %v160 = vpop.f32.mrf.mxu0
    %v161 = vadd.f32 %v140, %v160
    %v162 = vpop.f32.mrf.mxu0
    %163 = vdwg.mxu0
    %v164 = vld [vmem:[%s4] sm:$0x1]
    %v166 = vperm.slane %v164, 0
    %v168 = vadd.f32 %v161, %v166
    %v169 = vxor.u32 %v168, 2147483648
    %v170 = vmul.f32 %v169, 1.442695
    %v171 = vpow.pop %v170
    %v172 = vadd.f32 %v171, 1.0
    %v173 = vrcp.pop %v172
    %v174 = vmul.f32 %v172, %v173
    %v175 = vsub.f32 1.0, %v174
    %v176 = vmul.f32 %v173, %v175
    %v177 = vadd.f32 %v173, %v176
    %vm178 = vweird.f32 %v172
    %vm179 = vweird.f32 %v173
    %vm180 = vmor %vm178, %vm179
    %v181 = vsel %vm180, %v173, %v177
    %v182 = vand.u32 2147483647, %v172
    %vm183 = vcmp.eq.f32.partialorder %v182, 8.507059e+37
    %v184 = vand.u32 %v172, 2147483648
    %v185 = vor.u32 1.1754944e-38, %v184
    %v186 = vsel %vm183, %v185, %v181
    %v187 = vmul.f32 1.0, %v186
    %v188 = vtanh.pop %v168
    %190 = vrot.lane.b32.xlu0 %v106, 32
    %v191 = vpop.permute.xlu0 %190
    %v193 = vmul.f32 %v187, %v191
    %195 = vrot.lane.b32.xlu0 %v188, 64
    %v196 = vpop.permute.xlu0 %195
    %v198 = vmul.f32 %v187, %v196
    %200 = vrot.lane.b32.xlu0 %v198, 32
    %v201 = vpop.permute.xlu0 %200
    %v203 = vadd.f32 %v193, %v201
    %v204 = vtanh.pop %v203
    %206 = vrot.lane.b32.xlu0 %v204, 64
    %v207 = vpop.permute.xlu0 %206
    %v209 = vmul.f32 %v187, %v207
    %s210 = scalar_lea.vmem [#allocation5], 8
    %v211 = vld [vmem:[%s210] sm:$0xff]
    %s212 = scalar_lea.vmem [#allocation7], 8
    %v213 = vld [vmem:[%s212] sm:$0xff]
    %v214 = vpack.c.bf16 %v209, %v209
    %s215 = scalar_lea.vmem [#allocation8], 32
    %v216 = vld [vmem:[%s215] sm:$0xf]
    %v217 = vld [vmem:[%s215 + $0x4] sm:$0xf]
    %v218 = vld [vmem:[%s215 + $0x8] sm:$0xf]
    %v219 = vld [vmem:[%s215 + $0xc] sm:$0xf]
    %v220 = vpack.c.bf16 %v211, %v211
    %v221 = vld [vmem:[%s215 + $0x10] sm:$0xf]
    %v222 = vld [vmem:[%s215 + $0x14] sm:$0xf]
    %v223 = vld [vmem:[%s215 + $0x18] sm:$0xf]
    %v224 = vld [vmem:[%s215 + $0x1c] sm:$0xf]
    %v229 = vunpack.c.l.b16 %v221
    %v230 = vunpack.c.l.b16 %v222
    %v231 = vunpack.c.l.b16 %v223
    %v232 = vunpack.c.l.b16 %v224
    %v233 = vpack.c.b16 %v230, %v229
    %v234 = vpack.c.b16 %v232, %v231
    %v238 = vsel %vm126, %v220, 0
    %240 = vmatpush.bf16.msra.mxu0 0
    %241 = vmatpush.bf16.msra.mxu0 0
    %242 = vmatpush.bf16.msra.mxu0 0
    %243 = vmatpush.bf16.msra.mxu0 0
    %244 = vmatpush.bf16.msra.mxu0 0
    %245 = vmatpush.bf16.msra.mxu0 0
    %246 = vmatpush.bf16.msra.mxu0 %v234
    %247 = vmatpush.bf16.msra.mxu0 %v233
    %248 = vmatmul.bf16.gmra.mxu0 %v238
    %v249 = vpop.f32.mrf.mxu0
    %v250 = vadd.f32 0.0, %v249
    %v251 = vpop.f32.mrf.mxu0
    %252 = vdwg.mxu0
    %254 = vrot.lane.b32.xlu0 %v214, 32
    %v255 = vpop.permute.xlu0 %254
    %v260 = vunpack.c.l.b16 %v216
    %v261 = vunpack.c.l.b16 %v217
    %v262 = vunpack.c.l.b16 %v218
    %v263 = vunpack.c.l.b16 %v219
    %v264 = vpack.c.b16 %v261, %v260
    %v265 = vpack.c.b16 %v263, %v262
    %v269 = vsel %vm126, %v255, 0
    %271 = vmatpush.bf16.msra.mxu0 0
    %272 = vmatpush.bf16.msra.mxu0 0
    %273 = vmatpush.bf16.msra.mxu0 0
    %274 = vmatpush.bf16.msra.mxu0 0
    %275 = vmatpush.bf16.msra.mxu0 0
    %276 = vmatpush.bf16.msra.mxu0 0
    %277 = vmatpush.bf16.msra.mxu0 %v265
    %278 = vmatpush.bf16.msra.mxu0 %v264
    %279 = vmatmul.bf16.gmra.mxu0 %v269
    %v280 = vpop.f32.mrf.mxu0
    %v281 = vadd.f32 %v250, %v280
    %v282 = vpop.f32.mrf.mxu0
    %283 = vdwg.mxu0
    %s284 = scalar_lea.vmem %s4, 1
    %v285 = vld [vmem:[%s284] sm:$0x1]
    %v287 = vperm.slane %v285, 0
    %v289 = vadd.f32 %v281, %v287
    %v290 = vxor.u32 %v289, 2147483648
    %v291 = vmul.f32 %v290, 1.442695
    %v292 = vpow.pop %v291
    %v293 = vadd.f32 %v292, 1.0
    %v294 = vrcp.pop %v293
    %v295 = vmul.f32 %v293, %v294
    %v296 = vsub.f32 1.0, %v295
    %v297 = vmul.f32 %v294, %v296
    %v298 = vadd.f32 %v294, %v297
    %vm299 = vweird.f32 %v293
    %vm300 = vweird.f32 %v294
    %vm301 = vmor %vm299, %vm300
    %v302 = vsel %vm301, %v294, %v298
    %v303 = vand.u32 2147483647, %v293
    %vm304 = vcmp.eq.f32.partialorder %v303, 8.507059e+37
    %v305 = vand.u32 %v293, 2147483648
    %v306 = vor.u32 1.1754944e-38, %v305
    %v307 = vsel %vm304, %v306, %v302
    %v308 = vmul.f32 1.0, %v307
    %v309 = vtanh.pop %v289
    %311 = vrot.lane.b32.xlu0 %v213, 32
    %v312 = vpop.permute.xlu0 %311
    %v314 = vmul.f32 %v308, %v312
    %316 = vrot.lane.b32.xlu0 %v309, 64
    %v317 = vpop.permute.xlu0 %316
    %v319 = vmul.f32 %v308, %v317
    %321 = vrot.lane.b32.xlu0 %v319, 32
    %v322 = vpop.permute.xlu0 %321
    %v324 = vadd.f32 %v314, %v322
    %v325 = vtanh.pop %v324
    %327 = vrot.lane.b32.xlu0 %v325, 64
    %v328 = vpop.permute.xlu0 %327
    %v330 = vmul.f32 %v308, %v328
    %v331 = vpack.c.bf16 %v330, %v330
    %v332 = vld [vmem:[#allocation10] sm:$0xf]
    %v333 = vld [vmem:[#allocation10 + $0x4] sm:$0xf]
    %v334 = vld [vmem:[#allocation10 + $0x8] sm:$0xf]
    %v335 = vld [vmem:[#allocation10 + $0xc] sm:$0xf]
    %v336 = vld [vmem:[%s6] sm:$0x1]
    %v338 = vperm.slane %v336, 0
    %341 = vrot.lane.b32.xlu0 %v331, 32
    %v342 = vpop.permute.xlu0 %341
    %v347 = vunpack.c.l.b16 %v332
    %v348 = vunpack.c.l.b16 %v333
    %v349 = vunpack.c.l.b16 %v334
    %v350 = vunpack.c.l.b16 %v335
    %v351 = vpack.c.b16 %v348, %v347
    %v352 = vpack.c.b16 %v350, %v349
    %v356 = vsel %vm126, %v342, 0
    %358 = vmatpush.bf16.msra.mxu0 0
    %359 = vmatpush.bf16.msra.mxu0 0
    %360 = vmatpush.bf16.msra.mxu0 0
    %361 = vmatpush.bf16.msra.mxu0 0
    %362 = vmatpush.bf16.msra.mxu0 0
    %363 = vmatpush.bf16.msra.mxu0 0
    %364 = vmatpush.bf16.msra.mxu0 %v352
    %365 = vmatpush.bf16.msra.mxu0 %v351
    %366 = vmatmul.bf16.gmra.mxu0 %v356
    %v367 = vpop.f32.mrf.mxu0
    %v368 = vadd.f32 %v338, %v367
    %v369 = vpop.f32.mrf.mxu0
    %370 = vdwg.mxu0
    %372 = vrot.lane.b32.xlu0 %v209, 32
    %v373 = vpop.permute.xlu0 %372
    %376 = vrot.lane.b32.xlu0 %v330, 64
    %v377 = vpop.permute.xlu0 %376
    %380 = vrot.lane.b32.xlu0 %v203, 32
    %v381 = vpop.permute.xlu0 %380
    %384 = vrot.lane.b32.xlu0 %v324, 64
    %v385 = vpop.permute.xlu0 %384
    %v387 = vsel %vm126, %v373, %v377
    %vm388 = vcmask 523264
    %v389 = vsel %vm388, %v387, %v381
    %vm390 = vcmask 785408
    %v391 = vsel %vm390, %v389, %v385
    %392 = vst [vmem:[#allocation11] sm:$0xff] %v391
    %393 = vst [vmem:[#allocation11 + $0x8] sm:$0xff] %v368
    // Predicated region
    $region50: #{tpu_custom_call.1} parent=1 // pred_check
      _
    $region51: #{tpu_custom_call.1} parent=1 // pred_check_branch
      %395 = sbr.rel (0) target = $region53
    $region52: #{tpu_custom_call.1} parent=1 // pred_region
      %397 = vsyncadd [#allocation4], 0
      %s399 = sshll.u32 [#allocation11], 4
      %s400 = int_to_ptr.vmem [resolvable:$true] %s399
      %s401 = sshll.u32 %s7, 4
      %s402 = int_to_ptr.hbm [resolvable:$true] %s401
      %404 = dma.vmem_to_hbm [thread:$0]  %s400, 256, %s402, [#allocation4]
    $region53: #{tpu_custom_call.1} parent=1 // pred_fallthru
      _
    // Predicated region
    $region54: #{tpu_custom_call.1} parent=1 // pred_check
      _
    $region55: #{tpu_custom_call.1} parent=1 // pred_check_branch
      %406 = sbr.rel (0) target = $region57
    $region56: #{tpu_custom_call.1} parent=1 // pred_region
      %408 = dma.done [#allocation4], 256
    $region57: #{tpu_custom_call.1} parent=1 // pred_fallthru
      _
    %409 = vsyncpa [#allocation3], 1
    %410 = vsyncpa [#allocation6], 1
    %411 = vsyncpa [#allocation9], 1
    %412 = vsyncpa [#allocation4], 1

</llo_original>
